<compile_context>
chip_gen: v7x
topology: tpu7x:2x2x1
jax: 0.10.0
libtpu: 0.0.40
codegen_flags: <defaults>
</compile_context>

<pallas_src>
import math

import jax
import jax.numpy as jnp
import numpy as np
from jax.experimental import pallas as pl
from jax.experimental.pallas import tpu as pltpu


_VMEM = pl.BlockSpec(memory_space=pltpu.MemorySpace.VMEM)


# -----------------------------------------------------------------------------
# One-off probe: pin down pltpu.roll's shift convention on the actual hardware
# (expected to match jnp.roll: out[i] = in[i - shift]) so the im2col tap shifts
# below use the right sign either way.
# -----------------------------------------------------------------------------
def _roll_probe_kernel(x_ref, o_ref):
    o_ref[...] = pltpu.roll(x_ref[...], shift=1, axis=1)


def _roll_matches_jnp_roll():
    lane = jnp.broadcast_to(jnp.arange(128, dtype=jnp.float32)[None, :], (8, 128))
    rolled = pl.pallas_call(
        _roll_probe_kernel,
        out_shape=jax.ShapeDtypeStruct((8, 128), jnp.float32),
        in_specs=[_VMEM],
        out_specs=_VMEM,
    )(lane)
    rolled = np.asarray(jax.block_until_ready(rolled))
    return bool(rolled[0, 0] == 127.0)   # jnp.roll([0..127], 1)[0] == 127


# -----------------------------------------------------------------------------
# Kernel
# -----------------------------------------------------------------------------
def _make_revlayer_kernel(C, W_img, n_lanes, roll_is_jnp):
    """RevLayer forward, channel-major: activations are (C, N*H*W)."""

    def kernel(x_ref, mask_ref, an_s_ref, an_b_ref, tapmask_ref,
               w_ref, b_ref, gamma_ref, beta_ref, o_ref, col_ref):
        x = x_ref[...]                                   # (C, NHW)
        mask = mask_ref[...]                             # (C, NHW)

        # --- ActNorm (per-channel affine)  TODO(synk): assumed definition ---
        out = x * an_s_ref[...] + an_b_ref[...]          # (C,1) lane-broadcast
        same = out * (1.0 - mask)

        # --- im2col: 9 lane-rolled taps of `same`, zeroed at image borders ---
        # lane index j = n*H*W + h*W + w; tap (kh,kw) is a flat shift of dh*W+dw.
        # Any wraparound (row/image/global) lands only on lanes the border mask kills.
        for t in range(9):
            dh, dw = t // 3 - 1, t % 3 - 1
            s = dh * W_img + dw
            if s == 0:
                tap = same
            else:
                shift = (-s) % n_lanes if roll_is_jnp else s % n_lanes
                tap = pltpu.roll(same, shift=shift, axis=1)      # XLU lane rotate
            if t != 4:                                   # center tap: no border mask
                tap = tap * tapmask_ref[t:t + 1, :]      # (1,NHW) sublane-broadcast
            col_ref[t * C:(t + 1) * C, :] = tap          # full-lane row store

        # --- fused conv (mult || bias): ONE (2C,9C)@(9C,NHW) MXU contraction ---
        y = jnp.dot(w_ref[...], col_ref[...],
                    preferred_element_type=jnp.float32,
                    precision=jax.lax.Precision.HIGHEST)
        y = y + b_ref[...]                               # conv bias, (2C,1)

        # --- BatchNorm2d (training stats over N*H*W = lane axis) + ReLU ---
        mean = jnp.mean(y, axis=1, keepdims=True)        # (2C,1) lane reduce
        var = jnp.mean((y - mean) ** 2, axis=1, keepdims=True)
        scale = gamma_ref[...] * jax.lax.rsqrt(var + 1e-5)
        shift_bn = beta_ref[...] - mean * scale          # folded affine
        y = jnp.maximum(y * scale + shift_bn, 0.0)

        mult_out = y[:C, :]                              # (C, NHW)
        bias_out = y[C:, :]                              # (C, NHW)

        # gate = sigmoid(mult_out + 2): exact exp (EUP) + exact divide
        gate = 1.0 / (1.0 + jnp.exp(-(mult_out + 2.0)))

        changing = out * mask
        o_ref[...] = (gate * changing + bias_out) * mask + same

    return kernel


# -----------------------------------------------------------------------------
# Wrapper
# -----------------------------------------------------------------------------
def revlayer_forward(x_nchw, params, roll_is_jnp=True):
    """x_nchw: (N, C, H, W) float32.  Returns (N, C, H, W)."""
    N, C, H, W = x_nchw.shape
    HW = H * W
    NHW = N * HW

    # channel-major: channels on sublanes, flattened batch*space on lanes
    x_cm = jnp.transpose(x_nchw, (1, 0, 2, 3)).reshape(C, NHW).astype(jnp.float32)

    mask = params["mask"].astype(jnp.float32)                            # (C,H,W)
    mask_cm = jnp.broadcast_to(mask.reshape(C, 1, HW), (C, N, HW)).reshape(C, NHW)

    an_s = params["an_scale"].reshape(C, 1).astype(jnp.float32)
    an_b = params["an_bias"].reshape(C, 1).astype(jnp.float32)

    # Fuse the two ConvBlocks along the output-channel axis; im2col rows ordered
    # (kh, kw, ci) so the contraction is (2C, 9C) @ (9C, N*H*W).
    w_fused = jnp.concatenate([params["mult_w"], params["bias_w"]], axis=-1)  # (3,3,C,2C) HWIO
    w2d = w_fused.reshape(9 * C, 2 * C).T                                     # (2C, 9C)
    b_fused = jnp.concatenate([params["mult_b"], params["bias_b"]]).reshape(2 * C, 1)
    gamma_f = jnp.concatenate([params["mult_gamma"], params["bias_gamma"]]).reshape(2 * C, 1)
    beta_f = jnp.concatenate([params["mult_beta"], params["bias_beta"]]).reshape(2 * C, 1)

    # Border-validity masks for the 9 taps (zero where the 3x3 window leaves the image).
    j = np.arange(NHW)
    hh = (j % HW) // W
    ww = j % W
    tapmask = np.empty((9, NHW), np.float32)
    for t in range(9):
        dh, dw = t // 3 - 1, t % 3 - 1
        tapmask[t] = ((hh + dh >= 0) & (hh + dh < H) &
                      (ww + dw >= 0) & (ww + dw < W)).astype(np.float32)
    tapmask = jnp.asarray(tapmask)

    args = (x_cm, mask_cm, an_s, an_b, tapmask, w2d, b_fused, gamma_f, beta_f)

    out_cm = pl.pallas_call(
        _make_revlayer_kernel(C, W, NHW, roll_is_jnp),
        out_shape=jax.ShapeDtypeStruct((C, NHW), jnp.float32),
        in_specs=[_VMEM] * len(args),
        out_specs=_VMEM,
        scratch_shapes=[pltpu.VMEM((9 * C, NHW), jnp.float32)],   # im2col columns
    )(*args)

    return out_cm.reshape(C, N, H, W).transpose(1, 0, 2, 3)


# ----------------------------- pure-JAX reference -----------------------------
def _conv_block_ref(x_nchw, w_hwio, b, gamma, beta):
    y = jax.lax.conv_general_dilated(
        x_nchw, w_hwio, window_strides=(1, 1), padding="SAME",
        dimension_numbers=("NCHW", "HWIO", "NCHW"),
        precision=jax.lax.Precision.HIGHEST)
    y = y + b.reshape(1, -1, 1, 1)
    mean = jnp.mean(y, axis=(0, 2, 3), keepdims=True)
    var = jnp.mean((y - mean) ** 2, axis=(0, 2, 3), keepdims=True)
    y = (y - mean) / jnp.sqrt(var + 1e-5)
    y = y * gamma.reshape(1, -1, 1, 1) + beta.reshape(1, -1, 1, 1)
    return jnp.maximum(y, 0.0)


def revlayer_forward_ref(x_nchw, params):
    x = x_nchw.astype(jnp.float32)
    mask = params["mask"][None].astype(jnp.float32)          # (1,C,H,W)
    out = (x * params["an_scale"].reshape(1, -1, 1, 1)
           + params["an_bias"].reshape(1, -1, 1, 1))
    changing, same = out * mask, out * (1.0 - mask)
    m = _conv_block_ref(same, params["mult_w"], params["mult_b"],
                        params["mult_gamma"], params["mult_beta"])
    bo = _conv_block_ref(same, params["bias_w"], params["bias_b"],
                         params["bias_gamma"], params["bias_beta"])
    changing = jax.nn.sigmoid(m + 2.0) * changing + bo
    return changing * mask + same


# --------------------------------- main ---------------------------------------
if __name__ == "__main__":
    N, C, H, W = 2, 4, 16, 16

    key = jax.random.PRNGKey(0)
    ks = jax.random.split(key, 10)

    # Checkerboard mask of shape (C,H,W) as in the PyTorch module (mask.size(0)=C).
    hh = jnp.arange(H)[:, None]
    ww = jnp.arange(W)[None, :]
    checker = ((hh + ww) % 2).astype(jnp.float32)            # (H,W)
    mask = jnp.broadcast_to(checker[None], (C, H, W))        # (C,H,W)

    bound = 1.0 / math.sqrt(C * 9)
    params = {
        "mask": mask,
        "an_scale": 1.0 + 0.1 * jax.random.normal(ks[0], (C,), jnp.float32),
        "an_bias": 0.1 * jax.random.normal(ks[1], (C,), jnp.float32),
        "mult_w": jax.random.uniform(ks[2], (3, 3, C, C), jnp.float32, -bound, bound),
        "mult_b": jax.random.uniform(ks[3], (C,), jnp.float32, -bound, bound),
        "mult_gamma": 1.0 + 0.1 * jax.random.normal(ks[4], (C,), jnp.float32),
        "mult_beta": 0.1 * jax.random.normal(ks[5], (C,), jnp.float32),
        "bias_w": jax.random.uniform(ks[6], (3, 3, C, C), jnp.float32, -bound, bound),
        "bias_b": jax.random.uniform(ks[7], (C,), jnp.float32, -bound, bound),
        "bias_gamma": 1.0 + 0.1 * jax.random.normal(ks[8], (C,), jnp.float32),
        "bias_beta": 0.1 * jax.random.normal(ks[9], (C,), jnp.float32),
    }

    x = jax.random.normal(jax.random.PRNGKey(42), (N, C, H, W), jnp.float32)

    roll_is_jnp = _roll_matches_jnp_roll()

    out = jax.block_until_ready(revlayer_forward(x, params, roll_is_jnp))
    ref = jax.block_until_ready(revlayer_forward_ref(x, params))

    # Tolerance re-tightened: full-precision MXU contraction + exact sigmoid.
    np.testing.assert_allclose(np.asarray(out), np.asarray(ref),
                               rtol=1e-4, atol=1e-4)

    print("KERNEL_OK")
</pallas_src>

<mosaic_0001>
module attributes {stable_mosaic.version = 11 : i64} {
  func.func @_roll_probe_kernel(%arg0: memref<8x128xf32, #tpu.memory_space<vmem>>, %arg1: memref<8x128xf32, #tpu.memory_space<vmem>>) attributes {dimension_semantics = [], scalar_prefetch = 0 : i64, scratch_operands = 0 : i64, tpu.core_type = #tpu.core_type<tc>} {
    %c0 = arith.constant 0 : index
    %c0_0 = arith.constant 0 : index
    %0 = vector.load %arg0[%c0, %c0_0] : memref<8x128xf32, #tpu.memory_space<vmem>>, vector<8x128xf32>
    %c1_i32 = arith.constant 1 : i32
    %1 = tpu.dynamic_rotate %0 by %c1_i32 dim 1 : vector<8x128xf32>, i32 -> vector<8x128xf32>
    %c0_1 = arith.constant 0 : index
    %c0_2 = arith.constant 0 : index
    %2 = vector.load %arg1[%c0_1, %c0_2] : memref<8x128xf32, #tpu.memory_space<vmem>>, vector<8x128xf32>
    tpu.vector_store %arg1[%c0_1, %c0_2], %1 {strides = array<i32>} : memref<8x128xf32, #tpu.memory_space<vmem>>, vector<8x128xf32>,
    return
  }
}

</mosaic_0001>

<llo_original>
// kernel: tpu_custom_call.1
$region0: #{tpu_custom_call.1}
  #allocation0 [shape = 'u32[]', space=smem, size = 0x4, offset = 0x4, fixed_abs, tag = 'smem constant byte address 0x4 - core index']
  #allocation1 [shape = 'u32[144,128]{1,0:T(1,128)}', space=vmem, size = 0x12000, scoped, tag = 'internal scratch']
  %s0 = inlined_call_operand.hbm [shape: f32[8,128], index: 0, kind: input, shape index: {}]
  %s1 = inlined_call_operand.hbm [shape: f32[8,128], index: 1, kind: output, shape index: {}]
  %s2 = sld [smem:[#allocation0]]
  $region18: #{tpu_custom_call.1} parent=0
    _
  %s4 = ssub.s32 1, %s2
  %s5 = scalar_select 0, %s4, %s2
  $region1: #{tpu_custom_call.1} parent=0
    #allocation2 [shape = 'u8[4096]{0}', space=vmem, size = 0x1000, scoped, tag = 'input window, operand 0, single buffered']
    #allocation3 [shape = 's32[1]{0}', space=sflag, size = 0x4, scoped, tag = 'scoped memory for tpu_custom_call.1']
    #allocation4 [shape = 's32[1]{0}', space=sflag, size = 0x4, scoped, tag = 'scoped memory for tpu_custom_call.1']
    #allocation5 [shape = 'u8[4096]{0}', space=vmem, size = 0x1000, scoped, tag = 'output window, operand 0, single buffered']
    %6 = vsyncpa [#allocation3], 0
    %7 = vsyncpa [#allocation4], 0
    // Predicated region
    $region2: #{tpu_custom_call.1} parent=1 // pred_check
      _
    $region3: #{tpu_custom_call.1} parent=1 // pred_check_branch
      %9 = sbr.rel (0) target = $region5
    $region4: #{tpu_custom_call.1} parent=1 // pred_region
      %s11 = ssub.s32 128, 128
      %12 = vsyncadd [#allocation3], %s11
      %s14 = sshll.u32 [#allocation2], 4
      %s15 = int_to_ptr.vmem [resolvable:$true] %s14
      %17 = dma.hbm_to_vmem [thread:$0]  %s0, 128, %s15, [#allocation3]
    $region5: #{tpu_custom_call.1} parent=1 // pred_fallthru
      _
    // Predicated region
    $region6: #{tpu_custom_call.1} parent=1 // pred_check
      _
    $region7: #{tpu_custom_call.1} parent=1 // pred_check_branch
      %19 = sbr.rel (0) target = $region9
    $region8: #{tpu_custom_call.1} parent=1 // pred_region
      %20 = dma.done [#allocation3], 128
    $region9: #{tpu_custom_call.1} parent=1 // pred_fallthru
      _
    %v21 = vld [vmem:[#allocation2] sm:$0xff]
    %22 = vrot.lane.b32.xlu0 %v21, 1
    %v23 = vpop.permute.xlu0 %22
    %24 = vst [vmem:[#allocation5] sm:$0xff] %v23
    // Predicated region
    $region10: #{tpu_custom_call.1} parent=1 // pred_check
      _
    $region11: #{tpu_custom_call.1} parent=1 // pred_check_branch
      %26 = sbr.rel (0) target = $region13
    $region12: #{tpu_custom_call.1} parent=1 // pred_region
      %s28 = ssub.s32 128, 128
      %29 = vsyncadd [#allocation4], %s28
      %s31 = sshll.u32 [#allocation5], 4
      %s32 = int_to_ptr.vmem [resolvable:$true] %s31
      %34 = dma.vmem_to_hbm [thread:$0]  %s32, 128, %s1, [#allocation4]
    $region13: #{tpu_custom_call.1} parent=1 // pred_fallthru
      _
    // Predicated region
    $region14: #{tpu_custom_call.1} parent=1 // pred_check
      _
    $region15: #{tpu_custom_call.1} parent=1 // pred_check_branch
      %36 = sbr.rel (0) target = $region17
    $region16: #{tpu_custom_call.1} parent=1 // pred_region
      %37 = dma.done [#allocation4], 128
    $region17: #{tpu_custom_call.1} parent=1 // pred_fallthru
      _
    %38 = vsyncpa [#allocation3], 1
    %39 = vsyncpa [#allocation4], 1

</llo_original>
